<compile_context>
chip_gen: v5e
topology: v5e:2x2
jax: 0.10.0
libtpu: 0.0.40
codegen_flags: <defaults>
</compile_context>

<pallas_src>
import jax
import jax.numpy as jnp
from jax.experimental import pallas as pl
from jax.experimental.pallas import tpu as pltpu

# ----- irreps dimensions -------------------------------------------------------------
MUL_IN_S, MUL_IN_V = 8, 4            # input:  8x0e + 4x1e
MUL_MID_S, MUL_MID_V = 16, 8         # mid:   16x0e + 8x1e
MUL_OUT_S, MUL_OUT_V = 8, 4          # output: 8x0e + 4x1e

D_IN = MUL_IN_S + 3 * MUL_IN_V       # 20
D_OUT = MUL_OUT_S + 3 * MUL_OUT_V    # 20
D_MID = MUL_MID_S + 3 * MUL_MID_V    # 40  (gated mid width = fctp_2 input)

TN_MAX = 4096                        # max nodes per tile (sweepable)
LANE = 128                           # lane width; node-tile must be a multiple
MIN_TILES = 4                        # keep >= 4 tiles when N allows (v7x megacore: 2 TCs)


# ----- Pallas kernel (feature-major tiles: nodes on the lane axis) ---------------------
def ffn_kernel(xt_ref, w1a_ref, b1a_ref, w1g_ref, b1g_ref, w2_ref, b2_ref, ot_ref):
    xt = xt_ref[...]                                                       # (D_IN, TN)

    # fctp_1 value path and pre-sigmoid multiplier path (gate fused into the matmul).
    ha = jnp.dot(w1a_ref[...], xt, preferred_element_type=jnp.float32) + b1a_ref[...]   # (D_MID, TN)
    hg = jnp.dot(w1g_ref[...], xt, preferred_element_type=jnp.float32) + b1g_ref[...]   # (D_MID, TN)
    mid = ha * jax.nn.sigmoid(hg)      # scalars: SiLU; vectors: hv * sigmoid(gate)      (D_MID, TN)

    # fctp_2 (block-diagonal, fused) + single lane-dense store.
    out = jnp.dot(w2_ref[...], mid, preferred_element_type=jnp.float32) + b2_ref[...]    # (D_OUT, TN)
    ot_ref[...] = out.astype(ot_ref.dtype)


def feed_forward_network(x, params):
    """x: (N, D_IN) node features (f32 or bf16). Returns (N, D_OUT) in x.dtype."""
    N, d = x.shape
    assert d == D_IN
    w1a, b1a, w1g, b1g, w2, b2 = params

    # Node-tile selection: lane-aligned, <= TN_MAX, and >= MIN_TILES tiles when N is large.
    tn = pl.cdiv(N, MIN_TILES)
    tn = ((tn + LANE - 1) // LANE) * LANE
    tn = max(LANE, min(TN_MAX, tn))
    num_tiles = pl.cdiv(N, tn)
    n_pad = num_tiles * tn

    # Pad and flip to feature-major (D_IN, n_pad). Callers storing features channels-first
    # can feed that layout directly and skip this transpose.
    xt = jnp.pad(x, ((0, n_pad - N), (0, 0))).T

    full = lambda a: pl.BlockSpec(a.shape, lambda i: (0, 0))
    out_t = pl.pallas_call(
        ffn_kernel,
        out_shape=jax.ShapeDtypeStruct((D_OUT, n_pad), x.dtype),
        grid=(num_tiles,),
        in_specs=[
            pl.BlockSpec((D_IN, tn), lambda i: (0, i)),
            full(w1a), full(b1a), full(w1g), full(b1g), full(w2), full(b2),
        ],
        out_specs=pl.BlockSpec((D_OUT, tn), lambda i: (0, i)),
        compiler_params=pltpu.CompilerParams(dimension_semantics=("parallel",)),
    )(xt, w1a, b1a, w1g, b1g, w2, b2)
    return out_t.T[:N]


# ----- deterministic parameter construction (synthetic; fan-in scaled like rescale) ----
def make_params(key):
    ks = jax.random.split(key, 6)
    H0 = MUL_MID_S + MUL_MID_V                   # 24: [16 scalars | 8 gates], both 0e -> biased
    # fctp_1: 0e path mixes 8 -> (16 scalars + 8 gates); 1e path mixes 4 -> 8 multiplicities
    w1_0e = jax.random.normal(ks[0], (MUL_IN_S, H0), jnp.float32) / jnp.sqrt(MUL_IN_S)
    b1_0e = jax.random.normal(ks[1], (1, H0), jnp.float32) * 0.1
    w1_1e = jax.random.normal(ks[2], (MUL_IN_V, MUL_MID_V), jnp.float32) / jnp.sqrt(MUL_IN_V)
    # fctp_2
    w2_0e = jax.random.normal(ks[3], (MUL_MID_S, MUL_OUT_S), jnp.float32) / jnp.sqrt(MUL_MID_S)
    b2_0e = jax.random.normal(ks[4], (1, MUL_OUT_S), jnp.float32) * 0.1
    w2_1e = jax.random.normal(ks[5], (MUL_MID_V, MUL_OUT_V), jnp.float32) / jnp.sqrt(MUL_MID_V)

    eye3 = jnp.eye(3, dtype=jnp.float32)
    rep3 = jnp.ones((3, 1), jnp.float32)

    w1_s = w1_0e[:, :MUL_MID_S]                  # (8, 16)  input scalars -> mid scalars
    w1_g = w1_0e[:, MUL_MID_S:]                  # (8, 8)   input scalars -> gates
    b1_s = b1_0e[:, :MUL_MID_S]                  # (1, 16)
    b1_g = b1_0e[:, MUL_MID_S:]                  # (1, 8)

    # --- fctp_1 value path, feature-major:  ha = W1a @ x^T + b1a,  shape (D_MID, TN) ----
    w1a = jnp.zeros((D_MID, D_IN), jnp.float32)
    w1a = w1a.at[:MUL_MID_S, :MUL_IN_S].set(w1_s.T)                        # scalar block
    w1a = w1a.at[MUL_MID_S:, MUL_IN_S:].set(jnp.kron(w1_1e.T, eye3))       # vector block (24,12)
    b1a = jnp.concatenate([b1_s.T, jnp.zeros((3 * MUL_MID_V, 1), jnp.float32)], axis=0)  # (40,1)

    # --- fctp_1 pre-sigmoid multiplier path: hg = W1g @ x^T + b1g --------------------
    #     scalar rows reuse the scalar weights (SiLU); vector rows carry the gate weights
    #     replicated onto each vector's 3 components.
    w1g = jnp.zeros((D_MID, D_IN), jnp.float32)
    w1g = w1g.at[:MUL_MID_S, :MUL_IN_S].set(w1_s.T)
    w1g = w1g.at[MUL_MID_S:, :MUL_IN_S].set(jnp.kron(w1_g.T, rep3))        # (24, 8)
    b1g = jnp.concatenate([b1_s.T, jnp.kron(b1_g.T, rep3)], axis=0)        # (40, 1)

    # --- fctp_2, feature-major: out^T = W2 @ mid + b2 --------------------------------
    w2 = jnp.zeros((D_OUT, D_MID), jnp.float32)
    w2 = w2.at[:MUL_OUT_S, :MUL_MID_S].set(w2_0e.T)
    w2 = w2.at[MUL_OUT_S:, MUL_MID_S:].set(jnp.kron(w2_1e.T, eye3))        # (12, 24)
    b2 = jnp.concatenate([b2_0e.T, jnp.zeros((3 * MUL_OUT_V, 1), jnp.float32)], axis=0)  # (20,1)

    fused = (w1a, b1a, w1g, b1g, w2, b2)
    raw = (w1_0e, b1_0e, w1_1e, w2_0e, b2_0e, w2_1e)
    return fused, raw


# ----- pure-JAX reference (same math, irrep-structured, node-major) --------------------
def reference(x, raw):
    w1_0e, b1_0e, w1_1e, w2_0e, b2_0e, w2_1e = raw
    N = x.shape[0]
    xs = x[:, :MUL_IN_S]
    xv = x[:, MUL_IN_S:].reshape(N, MUL_IN_V, 3)
    h0 = xs @ w1_0e + b1_0e
    hv = jnp.einsum("nid,io->nod", xv, w1_1e)
    mid_s = jax.nn.silu(h0[:, :MUL_MID_S])
    gate = jax.nn.sigmoid(h0[:, MUL_MID_S:])
    mid_v = hv * gate[:, :, None]
    o_s = mid_s @ w2_0e + b2_0e
    o_v = jnp.einsum("nid,io->nod", mid_v, w2_1e)
    return jnp.concatenate([o_s, o_v.reshape(N, -1)], axis=1)


if __name__ == "__main__":
    key = jax.random.PRNGKey(0)
    kx, kp = jax.random.split(key)
    N = 1000                                     # not a tile multiple: exercises padding + 4-tile grid
    x = jax.random.normal(kx, (N, D_IN), jnp.float32)
    params, raw = make_params(kp)

    out = feed_forward_network(x, params)
    out = jax.block_until_ready(out)

    ref = reference(x, raw)
    assert out.shape == (N, D_OUT)
    assert jnp.allclose(out, ref, atol=2e-5, rtol=2e-5), "mismatch vs reference"
    print("KERNEL_OK")
</pallas_src>

<mosaic_0001>
module attributes {stable_mosaic.version = 11 : i64} {
  func.func @ffn_kernel(%arg0: i32, %arg1: memref<20x256xf32, #tpu.memory_space<vmem>>, %arg2: memref<40x20xf32, #tpu.memory_space<vmem>>, %arg3: memref<40x1xf32, #tpu.memory_space<vmem>>, %arg4: memref<40x20xf32, #tpu.memory_space<vmem>>, %arg5: memref<40x1xf32, #tpu.memory_space<vmem>>, %arg6: memref<20x40xf32, #tpu.memory_space<vmem>>, %arg7: memref<20x1xf32, #tpu.memory_space<vmem>>, %arg8: memref<20x256xf32, #tpu.memory_space<vmem>>) attributes {dimension_semantics = [#tpu.dimension_semantics<parallel>], iteration_bounds = array<i64: 4>, scalar_prefetch = 0 : i64, scratch_operands = 0 : i64, tpu.core_type = #tpu.core_type<tc>, window_params = [{transform_indices = @transform_0, window_bounds = array<i64: 20, 256>}, {pipeline_mode = #tpu.pipeline_mode<synchronous>, transform_indices = @transform_1, window_bounds = array<i64: 40, 20>}, {pipeline_mode = #tpu.pipeline_mode<synchronous>, transform_indices = @transform_2, window_bounds = array<i64: 40, 1>}, {pipeline_mode = #tpu.pipeline_mode<synchronous>, transform_indices = @transform_3, window_bounds = array<i64: 40, 20>}, {pipeline_mode = #tpu.pipeline_mode<synchronous>, transform_indices = @transform_4, window_bounds = array<i64: 40, 1>}, {pipeline_mode = #tpu.pipeline_mode<synchronous>, transform_indices = @transform_5, window_bounds = array<i64: 20, 40>}, {pipeline_mode = #tpu.pipeline_mode<synchronous>, transform_indices = @transform_6, window_bounds = array<i64: 20, 1>}, {transform_indices = @transform_7, window_bounds = array<i64: 20, 256>}]} {
    %c0 = arith.constant 0 : index
    %c0_0 = arith.constant 0 : index
    %0 = vector.load %arg1[%c0, %c0_0] : memref<20x256xf32, #tpu.memory_space<vmem>>, vector<20x256xf32>
    %c0_1 = arith.constant 0 : index
    %c0_2 = arith.constant 0 : index
    %1 = vector.load %arg2[%c0_1, %c0_2] : memref<40x20xf32, #tpu.memory_space<vmem>>, vector<40x20xf32>
    %cst = arith.constant dense<0.000000e+00> : vector<40x256xf32>
    %2 = tpu.matmul %1, %0, %cst {dimension_numbers = #tpu.dot_dimension_numbers<[1], [0], [0], [1], [0, 0, 1, 1], [], []>} : vector<40x20xf32>, vector<20x256xf32>, vector<40x256xf32> -> vector<40x256xf32>
    %c0_3 = arith.constant 0 : index
    %c0_4 = arith.constant 0 : index
    %3 = vector.load %arg3[%c0_3, %c0_4] : memref<40x1xf32, #tpu.memory_space<vmem>>, vector<40x1xf32>
    %4 = vector.broadcast %3 : vector<40x1xf32> to vector<40x256xf32>
    %5 = arith.addf %2, %4 : vector<40x256xf32>
    %c0_5 = arith.constant 0 : index
    %c0_6 = arith.constant 0 : index
    %6 = vector.load %arg4[%c0_5, %c0_6] : memref<40x20xf32, #tpu.memory_space<vmem>>, vector<40x20xf32>
    %cst_7 = arith.constant dense<0.000000e+00> : vector<40x256xf32>
    %7 = tpu.matmul %6, %0, %cst_7 {dimension_numbers = #tpu.dot_dimension_numbers<[1], [0], [0], [1], [0, 0, 1, 1], [], []>} : vector<40x20xf32>, vector<20x256xf32>, vector<40x256xf32> -> vector<40x256xf32>
    %c0_8 = arith.constant 0 : index
    %c0_9 = arith.constant 0 : index
    %8 = vector.load %arg5[%c0_8, %c0_9] : memref<40x1xf32, #tpu.memory_space<vmem>>, vector<40x1xf32>
    %9 = vector.broadcast %8 : vector<40x1xf32> to vector<40x256xf32>
    %10 = arith.addf %7, %9 : vector<40x256xf32>
    %11 = arith.negf %10 : vector<40x256xf32>
    %12 = math.exp %11 : vector<40x256xf32>
    %cst_10 = arith.constant 1.000000e+00 : f32
    %13 = vector.broadcast %cst_10 : f32 to vector<40x256xf32>
    %14 = arith.addf %13, %12 : vector<40x256xf32>
    %15 = arith.divf %13, %14 : vector<40x256xf32>
    %16 = arith.mulf %5, %15 : vector<40x256xf32>
    %c0_11 = arith.constant 0 : index
    %c0_12 = arith.constant 0 : index
    %17 = vector.load %arg6[%c0_11, %c0_12] : memref<20x40xf32, #tpu.memory_space<vmem>>, vector<20x40xf32>
    %cst_13 = arith.constant dense<0.000000e+00> : vector<20x256xf32>
    %18 = tpu.matmul %17, %16, %cst_13 {dimension_numbers = #tpu.dot_dimension_numbers<[1], [0], [0], [1], [0, 0, 1, 1], [], []>} : vector<20x40xf32>, vector<40x256xf32>, vector<20x256xf32> -> vector<20x256xf32>
    %c0_14 = arith.constant 0 : index
    %c0_15 = arith.constant 0 : index
    %19 = vector.load %arg7[%c0_14, %c0_15] : memref<20x1xf32, #tpu.memory_space<vmem>>, vector<20x1xf32>
    %20 = vector.broadcast %19 : vector<20x1xf32> to vector<20x256xf32>
    %21 = arith.addf %18, %20 : vector<20x256xf32>
    %c0_16 = arith.constant 0 : index
    %c0_17 = arith.constant 0 : index
    %22 = vector.load %arg8[%c0_16, %c0_17] : memref<20x256xf32, #tpu.memory_space<vmem>>, vector<20x256xf32>
    tpu.vector_store %arg8[%c0_16, %c0_17], %21 {strides = array<i32>} : memref<20x256xf32, #tpu.memory_space<vmem>>, vector<20x256xf32>,
    return
  }
  func.func @transform_0(%arg0: i32) -> (i32, i32) {
    %c0_i32 = arith.constant 0 : i32
    %c0_i32_0 = arith.constant 0 : i32
    return %c0_i32, %arg0 : i32, i32
  }
  func.func @transform_1(%arg0: i32) -> (i32, i32) {
    %c0_i32 = arith.constant 0 : i32
    %c0_i32_0 = arith.constant 0 : i32
    %c0_i32_1 = arith.constant 0 : i32
    return %c0_i32, %c0_i32_0 : i32, i32
  }
  func.func @transform_2(%arg0: i32) -> (i32, i32) {
    %c0_i32 = arith.constant 0 : i32
    %c0_i32_0 = arith.constant 0 : i32
    %c0_i32_1 = arith.constant 0 : i32
    return %c0_i32, %c0_i32_0 : i32, i32
  }
  func.func @transform_3(%arg0: i32) -> (i32, i32) {
    %c0_i32 = arith.constant 0 : i32
    %c0_i32_0 = arith.constant 0 : i32
    %c0_i32_1 = arith.constant 0 : i32
    return %c0_i32, %c0_i32_0 : i32, i32
  }
  func.func @transform_4(%arg0: i32) -> (i32, i32) {
    %c0_i32 = arith.constant 0 : i32
    %c0_i32_0 = arith.constant 0 : i32
    %c0_i32_1 = arith.constant 0 : i32
    return %c0_i32, %c0_i32_0 : i32, i32
  }
  func.func @transform_5(%arg0: i32) -> (i32, i32) {
    %c0_i32 = arith.constant 0 : i32
    %c0_i32_0 = arith.constant 0 : i32
    %c0_i32_1 = arith.constant 0 : i32
    return %c0_i32, %c0_i32_0 : i32, i32
  }
  func.func @transform_6(%arg0: i32) -> (i32, i32) {
    %c0_i32 = arith.constant 0 : i32
    %c0_i32_0 = arith.constant 0 : i32
    %c0_i32_1 = arith.constant 0 : i32
    return %c0_i32, %c0_i32_0 : i32, i32
  }
  func.func @transform_7(%arg0: i32) -> (i32, i32) {
    %c0_i32 = arith.constant 0 : i32
    %c0_i32_0 = arith.constant 0 : i32
    return %c0_i32, %arg0 : i32, i32
  }
}

</mosaic_0001>

<llo_original>
// kernel: tpu_custom_call.1
$region0: #{tpu_custom_call.1}
  #allocation0 [shape = 'u32[]', space=smem, size = 0x4, offset = 0x4, fixed_abs, tag = 'smem constant byte address 0x4 - core index']
  #allocation1 [shape = 'u32[72,128]{1,0:T(1,128)}', space=vmem, size = 0x9000, scoped, tag = 'internal scratch']
  %s0 = inlined_call_operand.hbm [shape: f32[20,1024], index: 0, kind: input, shape index: {}]
  %s1 = inlined_call_operand.vmem [shape: f32[40,20], index: 1, kind: input, shape index: {}]
  %s2 = inlined_call_operand.vmem [shape: f32[40,1], index: 2, kind: input, shape index: {}]
  %s3 = inlined_call_operand.vmem [shape: f32[40,20], index: 3, kind: input, shape index: {}]
  %s4 = inlined_call_operand.vmem [shape: f32[40,1], index: 4, kind: input, shape index: {}]
  %s5 = inlined_call_operand.vmem [shape: f32[20,40], index: 5, kind: input, shape index: {}]
  %s6 = inlined_call_operand.vmem [shape: f32[20,1], index: 6, kind: input, shape index: {}]
  %s7 = inlined_call_operand.hbm [shape: f32[20,1024], index: 7, kind: output, shape index: {}]
  %s8 = sld [smem:[#allocation0]]
  $region65: #{tpu_custom_call.1} parent=0
    _
  %s10 = ssub.s32 1, %s8
  %s11 = scalar_select 0, %s10, %s8
  $region1: #{tpu_custom_call.1} parent=0
    #allocation2 [shape = 'u8[49152]{0}', space=vmem, size = 0xc000, scoped, tag = 'input window, operand 0']
    #allocation3 [shape = 's32[2]{0}', space=sflag, size = 0x8, scoped, tag = 'scoped memory for tpu_custom_call.1']
    #allocation4 [shape = 's32[2]{0}', space=sflag, size = 0x8, scoped, tag = 'scoped memory for tpu_custom_call.1']
    #allocation5 [shape = 'u8[49152]{0}', space=vmem, size = 0xc000, scoped, tag = 'output window, operand 0']
    %12 = vsyncpa [#allocation3], 0
    %s13 = scalar_lea.sflag [#allocation3], 1
    %14 = vsyncpa %s13, 0
    %15 = vsyncpa [#allocation4], 0
    %s16 = scalar_lea.sflag [#allocation4], 1
    %17 = vsyncpa %s16, 0
    loop: start=0, step=1, limit=6
    $region2: #{tpu_custom_call.1} parent=1 // loop_pre_header
      _
    $region3: #{tpu_custom_call.1} parent=1 // loop_header
      %s19 = sphi 0, %s23
      %p20 = scmp.ge.s32.totalorder %s19, 6
      %s29 = sphi 0, %s31
      %s32 = sphi 0, %s29
      %s33 = sphi 0, %s32
      %s49 = sphi 0, %s33
      %s53 = sphi 0, %s53
      %s55 = sphi 0, %s53
      %s56 = sphi 0, %s55
      %s70 = sphi 0, %s56
      %s74 = sphi 0, %s74
      %s76 = sphi 0, %s74
      %s77 = sphi 0, %s76
      %s91 = sphi 0, %s77
      %s95 = sphi 0, %s95
      %s97 = sphi 0, %s95
      %s98 = sphi 0, %s97
      %s112 = sphi 0, %s98
      %s116 = sphi 0, %s116
      %s118 = sphi 0, %s116
      %s119 = sphi 0, %s118
      %s133 = sphi 0, %s119
      %s137 = sphi 0, %s137
      %s139 = sphi 0, %s137
      %s140 = sphi 0, %s139
      %s154 = sphi 0, %s140
      %s158 = sphi 0, %s158
      %s160 = sphi 0, %s158
      %s161 = sphi 0, %s160
      %s175 = sphi 0, %s161
      %s181 = sphi 0, %s183
      %s184 = sphi 0, %s181
      %s185 = sphi 0, %s184
      %s201 = sphi 0, %s185
    $region4: #{tpu_custom_call.1} parent=1 // loop_header_branch
      %22 = sbr.rel (%p20) target = $region8
    $region5: #{tpu_custom_call.1} parent=1 // loop_body
      %s24 = ssub.s32 %s19, 1
      %s25 = ssub.s32 %s19, 2
      %s26 = sadd.s32 %s19, 1
      %s27 = ssub.s32 %s19, %s26
      %p28 = scmp.eq.s32.totalorder %s27, 0
      %s30 = sadd.s32 %s29, 1
      %s31 = scalar_select %p28, %s29, %s30
      %p34 = pneg %p28
      %p35 = scmp.eq.s32.totalorder %s19, 3
      %p36 = por %p34, %p35
      %p37 = scmp.ne.s32.totalorder %s29, %s32
      %p38 = scmp.eq.s32.totalorder %s19, 0
      %p39 = por %p37, %p38
      %p40 = scmp.ne.s32.totalorder %s29, %s32
      %p41 = scmp.eq.s32.totalorder %s24, 3
      %p42 = por %p40, %p41
      %p43 = scmp.ne.s32.totalorder %s32, %s33
      %p44 = scmp.eq.s32.totalorder %s24, 0
      %p45 = por %p43, %p44
      %p46 = scmp.ne.s32.totalorder %s32, %s33
      %p47 = scmp.eq.s32.totalorder %s25, 3
      %p48 = por %p46, %p47
      %p50 = scmp.ne.s32.totalorder %s33, %s49
      %p51 = scmp.eq.s32.totalorder %s25, 0
      %p52 = por %p50, %p51
      %s54 = sadd.s32 %s53, 1
      %p57 = scmp.eq.s32.totalorder %s19, 3
      %p58 = scmp.ne.s32.totalorder %s53, %s55
      %p59 = scmp.eq.s32.totalorder %s19, 0
      %p60 = por %p58, %p59
      %p61 = scmp.ne.s32.totalorder %s53, %s55
      %p62 = scmp.eq.s32.totalorder %s24, 3
      %p63 = por %p61, %p62
      %p64 = scmp.ne.s32.totalorder %s55, %s56
      %p65 = scmp.eq.s32.totalorder %s24, 0
      %p66 = por %p64, %p65
      %p67 = scmp.ne.s32.totalorder %s55, %s56
      %p68 = scmp.eq.s32.totalorder %s25, 3
      %p69 = por %p67, %p68
      %p71 = scmp.ne.s32.totalorder %s56, %s70
      %p72 = scmp.eq.s32.totalorder %s25, 0
      %p73 = por %p71, %p72
      %s75 = sadd.s32 %s74, 1
      %p78 = scmp.eq.s32.totalorder %s19, 3
      %p79 = scmp.ne.s32.totalorder %s74, %s76
      %p80 = scmp.eq.s32.totalorder %s19, 0
      %p81 = por %p79, %p80
      %p82 = scmp.ne.s32.totalorder %s74, %s76
      %p83 = scmp.eq.s32.totalorder %s24, 3
      %p84 = por %p82, %p83
      %p85 = scmp.ne.s32.totalorder %s76, %s77
      %p86 = scmp.eq.s32.totalorder %s24, 0
      %p87 = por %p85, %p86
      %p88 = scmp.ne.s32.totalorder %s76, %s77
      %p89 = scmp.eq.s32.totalorder %s25, 3
      %p90 = por %p88, %p89
      %p92 = scmp.ne.s32.totalorder %s77, %s91
      %p93 = scmp.eq.s32.totalorder %s25, 0
      %p94 = por %p92, %p93
      %s96 = sadd.s32 %s95, 1
      %p99 = scmp.eq.s32.totalorder %s19, 3
      %p100 = scmp.ne.s32.totalorder %s95, %s97
      %p101 = scmp.eq.s32.totalorder %s19, 0
      %p102 = por %p100, %p101
      %p103 = scmp.ne.s32.totalorder %s95, %s97
      %p104 = scmp.eq.s32.totalorder %s24, 3
      %p105 = por %p103, %p104
      %p106 = scmp.ne.s32.totalorder %s97, %s98
      %p107 = scmp.eq.s32.totalorder %s24, 0
      %p108 = por %p106, %p107
      %p109 = scmp.ne.s32.totalorder %s97, %s98
      %p110 = scmp.eq.s32.totalorder %s25, 3
      %p111 = por %p109, %p110
      %p113 = scmp.ne.s32.totalorder %s98, %s112
      %p114 = scmp.eq.s32.totalorder %s25, 0
      %p115 = por %p113, %p114
      %s117 = sadd.s32 %s116, 1
      %p120 = scmp.eq.s32.totalorder %s19, 3
      %p121 = scmp.ne.s32.totalorder %s116, %s118
      %p122 = scmp.eq.s32.totalorder %s19, 0
      %p123 = por %p121, %p122
      %p124 = scmp.ne.s32.totalorder %s116, %s118
      %p125 = scmp.eq.s32.totalorder %s24, 3
      %p126 = por %p124, %p125
      %p127 = scmp.ne.s32.totalorder %s118, %s119
      %p128 = scmp.eq.s32.totalorder %s24, 0
      %p129 = por %p127, %p128
      %p130 = scmp.ne.s32.totalorder %s118, %s119
      %p131 = scmp.eq.s32.totalorder %s25, 3
      %p132 = por %p130, %p131
      %p134 = scmp.ne.s32.totalorder %s119, %s133
      %p135 = scmp.eq.s32.totalorder %s25, 0
      %p136 = por %p134, %p135
      %s138 = sadd.s32 %s137, 1
      %p141 = scmp.eq.s32.totalorder %s19, 3
      %p142 = scmp.ne.s32.totalorder %s137, %s139
      %p143 = scmp.eq.s32.totalorder %s19, 0
      %p144 = por %p142, %p143
      %p145 = scmp.ne.s32.totalorder %s137, %s139
      %p146 = scmp.eq.s32.totalorder %s24, 3
      %p147 = por %p145, %p146
      %p148 = scmp.ne.s32.totalorder %s139, %s140
      %p149 = scmp.eq.s32.totalorder %s24, 0
      %p150 = por %p148, %p149
      %p151 = scmp.ne.s32.totalorder %s139, %s140
      %p152 = scmp.eq.s32.totalorder %s25, 3
      %p153 = por %p151, %p152
      %p155 = scmp.ne.s32.totalorder %s140, %s154
      %p156 = scmp.eq.s32.totalorder %s25, 0
      %p157 = por %p155, %p156
      %s159 = sadd.s32 %s158, 1
      %p162 = scmp.eq.s32.totalorder %s19, 3
      %p163 = scmp.ne.s32.totalorder %s158, %s160
      %p164 = scmp.eq.s32.totalorder %s19, 0
      %p165 = por %p163, %p164
      %p166 = scmp.ne.s32.totalorder %s158, %s160
      %p167 = scmp.eq.s32.totalorder %s24, 3
      %p168 = por %p166, %p167
      %p169 = scmp.ne.s32.totalorder %s160, %s161
      %p170 = scmp.eq.s32.totalorder %s24, 0
      %p171 = por %p169, %p170
      %p172 = scmp.ne.s32.totalorder %s160, %s161
      %p173 = scmp.eq.s32.totalorder %s25, 3
      %p174 = por %p172, %p173
      %p176 = scmp.ne.s32.totalorder %s161, %s175
      %p177 = scmp.eq.s32.totalorder %s25, 0
      %p178 = por %p176, %p177
      %s179 = ssub.s32 %s19, %s26
      %p180 = scmp.eq.s32.totalorder %s179, 0
      %s182 = sadd.s32 %s181, 1
      %s183 = scalar_select %p180, %s181, %s182
      %p186 = pneg %p180
      %p187 = scmp.eq.s32.totalorder %s19, 3
      %p188 = por %p186, %p187
      %p189 = scmp.ne.s32.totalorder %s181, %s184
      %p190 = scmp.eq.s32.totalorder %s19, 0
      %p191 = por %p189, %p190
      %p192 = scmp.ne.s32.totalorder %s181, %s184
      %p193 = scmp.eq.s32.totalorder %s24, 3
      %p194 = por %p192, %p193
      %p195 = scmp.ne.s32.totalorder %s184, %s185
      %p196 = scmp.eq.s32.totalorder %s24, 0
      %p197 = por %p195, %p196
      %p198 = scmp.ne.s32.totalorder %s184, %s185
      %p199 = scmp.eq.s32.totalorder %s25, 3
      %p200 = por %p198, %p199
      %p202 = scmp.ne.s32.totalorder %s185, %s201
      %p203 = scmp.eq.s32.totalorder %s25, 0
      %p204 = por %p202, %p203
      %p205 = scmp.le.s32.totalorder 1, %s19
      %p206 = scmp.lt.s32.totalorder %s19, 5
      %p207 = pnand %p205, %p206
      %p208 = pneg %p207
      // Predicated region
      $region9: #{tpu_custom_call.1} parent=5 // pred_check
        _
      $region10: #{tpu_custom_call.1} parent=5 // pred_check_branch
        %210 = sbr.rel (%p207) target = $region12
      $region11: #{tpu_custom_call.1} parent=5 // pred_region
        %s211 = ssub.s32 %s19, 1
        // Predicated region
        $region13: #{tpu_custom_call.1} parent=11 // pred_check
          %p212 = pneg %p66
        $region14: #{tpu_custom_call.1} parent=11 // pred_check_branch
          %214 = sbr.rel (%p212) target = $region16
        $region15: #{tpu_custom_call.1} parent=11 // pred_region
          _
        $region16: #{tpu_custom_call.1} parent=11 // pred_fallthru
          _
        // Predicated region
        $region17: #{tpu_custom_call.1} parent=11 // pred_check
          %p215 = pneg %p87
        $region18: #{tpu_custom_call.1} parent=11 // pred_check_branch
          %217 = sbr.rel (%p215) target = $region20
        $region19: #{tpu_custom_call.1} parent=11 // pred_region
          _
        $region20: #{tpu_custom_call.1} parent=11 // pred_fallthru
          _
        // Predicated region
        $region21: #{tpu_custom_call.1} parent=11 // pred_check
          %p218 = pneg %p108
        $region22: #{tpu_custom_call.1} parent=11 // pred_check_branch
          %220 = sbr.rel (%p218) target = $region24
        $region23: #{tpu_custom_call.1} parent=11 // pred_region
          _
        $region24: #{tpu_custom_call.1} parent=11 // pred_fallthru
          _
        // Predicated region
        $region25: #{tpu_custom_call.1} parent=11 // pred_check
          %p221 = pneg %p129
        $region26: #{tpu_custom_call.1} parent=11 // pred_check_branch
          %223 = sbr.rel (%p221) target = $region28
        $region27: #{tpu_custom_call.1} parent=11 // pred_region
          _
        $region28: #{tpu_custom_call.1} parent=11 // pred_fallthru
          _
        // Predicated region
        $region29: #{tpu_custom_call.1} parent=11 // pred_check
          %p224 = pneg %p150
        $region30: #{tpu_custom_call.1} parent=11 // pred_check_branch
          %226 = sbr.rel (%p224) target = $region32
        $region31: #{tpu_custom_call.1} parent=11 // pred_region
          _
        $region32: #{tpu_custom_call.1} parent=11 // pred_fallthru
          _
        // Predicated region
        $region33: #{tpu_custom_call.1} parent=11 // pred_check
          %p227 = pneg %p171
        $region34: #{tpu_custom_call.1} parent=11 // pred_check_branch
          %229 = sbr.rel (%p227) target = $region36
        $region35: #{tpu_custom_call.1} parent=11 // pred_region
          _
        $region36: #{tpu_custom_call.1} parent=11 // pred_fallthru
          _
      $region12: #{tpu_custom_call.1} parent=5 // pred_fallthru
        _
      %p230 = scmp.lt.s32.totalorder %s19, 4
      // Predicated region
      $region37: #{tpu_custom_call.1} parent=5 // pred_check
        %p231 = pneg %p230
      $region38: #{tpu_custom_call.1} parent=5 // pred_check_branch
        %233 = sbr.rel (%p231) target = $region40
      $region39: #{tpu_custom_call.1} parent=5 // pred_region
        // Predicated region
        $region41: #{tpu_custom_call.1} parent=39 // pred_check
          %p234 = pneg %p39
        $region42: #{tpu_custom_call.1} parent=39 // pred_check_branch
          %236 = sbr.rel (%p234) target = $region44
        $region43: #{tpu_custom_call.1} parent=39 // pred_region
          %s237 = sand.u32 %s29, 1
          %s238 = scalar_lea.sflag [#allocation3], %s237
          %s239 = sand.u32 %s29, 1
          %s240 = smul.addr %s239, 48
          %s241 = scalar_lea.vmem [#allocation2], %s240
          %s242 = smul.u32 2, %s19
          %244 = vsyncadd %s238, 0
          %s245 = smul.addr %s242, 8
          %s246 = scalar_lea.hbm %s0, %s245
          %s247 = sshll.u32 %s246, 4
          %s248 = int_to_ptr.hbm [resolvable:$true] %s247
          %s249 = sshll.u32 %s241, 4
          %s250 = int_to_ptr.vmem [resolvable:$true] %s249
          %255 = dma.hbm_to_vmem [thread:$0]  %s248, 768, %s250, %s238, 1024, 256, 16
        $region44: #{tpu_custom_call.1} parent=39 // pred_fallthru
          _
      $region40: #{tpu_custom_call.1} parent=5 // pred_fallthru
        _
      %p256 = scmp.le.s32.totalorder 1, %s19
      %p257 = scmp.lt.s32.totalorder %s19, 5
      %p258 = pnand %p256, %p257
      %p259 = pneg %p258
      // Predicated region
      $region45: #{tpu_custom_call.1} parent=5 // pred_check
        _
      $region46: #{tpu_custom_call.1} parent=5 // pred_check_branch
        %261 = sbr.rel (%p258) target = $region48
      $region47: #{tpu_custom_call.1} parent=5 // pred_region
        %s262 = ssub.s32 %s19, 1
        %s263 = sand.u32 %s32, 1
        %s264 = scalar_lea.sflag [#allocation3], %s263
        %s265 = sand.u32 %s32, 1
        %s266 = smul.addr %s265, 48
        %s267 = scalar_lea.vmem [#allocation2], %s266
        // Predicated region
        $region49: #{tpu_custom_call.1} parent=47 // pred_check
          %p268 = pneg %p45
        $region50: #{tpu_custom_call.1} parent=47 // pred_check_branch
          %270 = sbr.rel (%p268) target = $region52
        $region51: #{tpu_custom_call.1} parent=47 // pred_region
          %272 = dma.done %s264, 768
        $region52: #{tpu_custom_call.1} parent=47 // pred_fallthru
          _
        %s273 = sand.u32 %s32, 1
        %s274 = scalar_lea.sflag [#allocation3], %s273
        %s275 = sand.u32 %s32, 1
        %s276 = smul.addr %s275, 48
        %s277 = scalar_lea.vmem [#allocation2], %s276
        %p278 = pneg %p45
        %p279 = pneg %p42
        %p280 = pneg %p66
        %p281 = pneg %p63
        %p282 = pneg %p87
        %p283 = pneg %p84
        %p284 = pneg %p108
        %p285 = pneg %p105
        %p286 = pneg %p129
        %p287 = pneg %p126
        %p288 = pneg %p150
        %p289 = pneg %p147
        %p290 = pneg %p171
        %p291 = pneg %p168
        %p292 = pneg %p197
        %p293 = pneg %p194
        %s294 = sand.u32 %s184, 1
        %s295 = scalar_lea.sflag [#allocation4], %s294
        %s296 = sand.u32 %s184, 1
        %s297 = smul.addr %s296, 48
        %s298 = scalar_lea.vmem [#allocation5], %s297
        %s299 = smul.u32 2, %s24
        %s300 = smul.u32 2, %s24
        %v301 = vld [vmem:[%s267] sm:$0xff]
        %v302 = vld [vmem:[%s267 + $0x8] sm:$0xff]
        %v303 = vld [vmem:[%s267 + $0x10] sm:$0xff]
        %v304 = vld [vmem:[%s267 + $0x18] sm:$0xff]
        %v305 = vld [vmem:[%s267 + $0x20] sm:$0xf]
        %v306 = vld [vmem:[%s267 + $0x28] sm:$0xf]
        %v307 = vld [vmem:[%s1] sm:$0xff]
        %v308 = vld [vmem:[%s1 + $0x8] sm:$0xff]
        %v309 = vld [vmem:[%s1 + $0x10] sm:$0xff]
        %v310 = vld [vmem:[%s1 + $0x18] sm:$0xff]
        %v311 = vld [vmem:[%s1 + $0x20] sm:$0xff]
        %v312 = vld [vmem:[%s2] sm:$0xff]
        %v313 = vld [vmem:[%s2 + $0x8] sm:$0xff]
        %v314 = vld [vmem:[%s2 + $0x10] sm:$0xff]
        %v315 = vld [vmem:[%s2 + $0x18] sm:$0xff]
        %v316 = vld [vmem:[%s2 + $0x20] sm:$0xff]
        %318 = vset.pattern.permute.xlu0 0
        %319 = vperm.xlu0 %318, %v312
        %v320 = vpop.permute.xlu0 %319
        %323 = vset.pattern.permute.xlu0 0
        %324 = vperm.xlu0 %323, %v313
        %v325 = vpop.permute.xlu0 %324
        %328 = vset.pattern.permute.xlu0 0
        %329 = vperm.xlu0 %328, %v314
        %v330 = vpop.permute.xlu0 %329
        %333 = vset.pattern.permute.xlu0 0
        %334 = vperm.xlu0 %333, %v315
        %v335 = vpop.permute.xlu0 %334
        %338 = vset.pattern.permute.xlu0 0
        %339 = vperm.xlu0 %338, %v316
        %v340 = vpop.permute.xlu0 %339
        %vm342 = vcmask 162816
        %v344 = vsel %vm342, %v307, 0
        %v347 = vsel %vm342, %v308, 0
        %v350 = vsel %vm342, %v309, 0
        %v353 = vsel %vm342, %v310, 0
        %v356 = vsel %vm342, %v311, 0
        %vm358 = vcmask 1043456
        %v360 = vsel %vm358, %v305, 0
        %v363 = vsel %vm358, %v306, 0
        %365 = vmatpush.msra.mxu0 0.0
        %366 = vmatpush.msra.mxu0 0.0
        %367 = vmatpush.msra.mxu0 0.0
        %368 = vmatpush.msra.mxu0 0.0
        %369 = vmatpush.msra.mxu0 0.0
        %370 = vmatpush.msra.mxu0 0.0
        %371 = vmatpush.msra.mxu0 0.0
        %372 = vmatpush.msra.mxu0 0.0
        %373 = vmatpush.msra.mxu0 0.0
        %374 = vmatpush.msra.mxu0 0.0
        %375 = vmatpush.msra.mxu0 0.0
        %376 = vmatpush.msra.mxu0 0.0
        %377 = vmatpush.msra.mxu0 0.0
        %378 = vmatpush.msra.mxu0 %v360
        %379 = vmatpush.msra.mxu0 %v303
        %380 = vmatpush.msra.mxu0 %v301
        %381 = vmatmul.f32.gmra.mxu0 %v344
        %v382 = vpop.f32.mrf.mxu0
        %v383 = vadd.f32 %v320, %v382
        %384 = vmatmul.f32.gmra.mxu0 %v347
        %v385 = vpop.f32.mrf.mxu0
        %v386 = vadd.f32 %v325, %v385
        %387 = vmatmul.f32.gmra.mxu0 %v350
        %v388 = vpop.f32.mrf.mxu0
        %v389 = vadd.f32 %v330, %v388
        %390 = vmatmul.f32.gmra.mxu0 %v353
        %v391 = vpop.f32.mrf.mxu0
        %v392 = vadd.f32 %v335, %v391
        %393 = vmatmul.f32.gmra.mxu0 %v356
        %v394 = vpop.f32.mrf.mxu0
        %v395 = vadd.f32 %v340, %v394
        %396 = vdwg.mxu0
        %397 = vmatpush.msra.mxu0 0.0
        %398 = vmatpush.msra.mxu0 0.0
        %399 = vmatpush.msra.mxu0 0.0
        %400 = vmatpush.msra.mxu0 0.0
        %401 = vmatpush.msra.mxu0 0.0
        %402 = vmatpush.msra.mxu0 0.0
        %403 = vmatpush.msra.mxu0 0.0
        %404 = vmatpush.msra.mxu0 0.0
        %405 = vmatpush.msra.mxu0 0.0
        %406 = vmatpush.msra.mxu0 0.0
        %407 = vmatpush.msra.mxu0 0.0
        %408 = vmatpush.msra.mxu0 0.0
        %409 = vmatpush.msra.mxu0 0.0
        %410 = vmatpush.msra.mxu0 %v363
        %411 = vmatpush.msra.mxu0 %v304
        %412 = vmatpush.msra.mxu0 %v302
        %413 = vmatmul.f32.gmra.mxu0 %v344
        %v414 = vpop.f32.mrf.mxu0
        %v415 = vadd.f32 %v320, %v414
        %416 = vmatmul.f32.gmra.mxu0 %v347
        %v417 = vpop.f32.mrf.mxu0
        %v418 = vadd.f32 %v325, %v417
        %419 = vmatmul.f32.gmra.mxu0 %v350
        %v420 = vpop.f32.mrf.mxu0
        %v421 = vadd.f32 %v330, %v420
        %422 = vmatmul.f32.gmra.mxu0 %v353
        %v423 = vpop.f32.mrf.mxu0
        %v424 = vadd.f32 %v335, %v423
        %425 = vmatmul.f32.gmra.mxu0 %v356
        %v426 = vpop.f32.mrf.mxu0
        %v427 = vadd.f32 %v340, %v426
        %428 = vdwg.mxu0
        %v429 = vld [vmem:[%s3] sm:$0xff]
        %v430 = vld [vmem:[%s3 + $0x8] sm:$0xff]
        %v431 = vld [vmem:[%s3 + $0x10] sm:$0xff]
        %v432 = vld [vmem:[%s3 + $0x18] sm:$0xff]
        %v433 = vld [vmem:[%s3 + $0x20] sm:$0xff]
        %v434 = vld [vmem:[%s4] sm:$0xff]
        %v435 = vld [vmem:[%s4 + $0x8] sm:$0xff]
        %v436 = vld [vmem:[%s4 + $0x10] sm:$0xff]
        %v437 = vld [vmem:[%s4 + $0x18] sm:$0xff]
        %v438 = vld [vmem:[%s4 + $0x20] sm:$0xff]
        %440 = vset.pattern.permute.xlu0 0
        %441 = vperm.xlu0 %440, %v434
        %v442 = vpop.permute.xlu0 %441
        %445 = vset.pattern.permute.xlu0 0
        %446 = vperm.xlu0 %445, %v435
        %v447 = vpop.permute.xlu0 %446
        %450 = vset.pattern.permute.xlu0 0
        %451 = vperm.xlu0 %450, %v436
        %v452 = vpop.permute.xlu0 %451
        %455 = vset.pattern.permute.xlu0 0
        %456 = vperm.xlu0 %455, %v437
        %v457 = vpop.permute.xlu0 %456
        %460 = vset.pattern.permute.xlu0 0
        %461 = vperm.xlu0 %460, %v438
        %v462 = vpop.permute.xlu0 %461
        %v465 = vsel %vm342, %v429, 0
        %v468 = vsel %vm342, %v430, 0
        %v471 = vsel %vm342, %v431, 0
        %v474 = vsel %vm342, %v432, 0
        %v477 = vsel %vm342, %v433, 0
        %479 = vmatpush.msra.mxu0 0.0
        %480 = vmatpush.msra.mxu0 0.0
        %481 = vmatpush.msra.mxu0 0.0
        %482 = vmatpush.msra.mxu0 0.0
        %483 = vmatpush.msra.mxu0 0.0
        %484 = vmatpush.msra.mxu0 0.0
        %485 = vmatpush.msra.mxu0 0.0
        %486 = vmatpush.msra.mxu0 0.0
        %487 = vmatpush.msra.mxu0 0.0
        %488 = vmatpush.msra.mxu0 0.0
        %489 = vmatpush.msra.mxu0 0.0
        %490 = vmatpush.msra.mxu0 0.0
        %491 = vmatpush.msra.mxu0 0.0
        %492 = vmatpush.msra.mxu0 %v360
        %493 = vmatpush.msra.mxu0 %v303
        %494 = vmatpush.msra.mxu0 %v301
        %495 = vmatmul.f32.gmra.mxu0 %v465
        %v496 = vpop.f32.mrf.mxu0
        %v497 = vadd.f32 %v442, %v496
        %498 = vmatmul.f32.gmra.mxu0 %v468
        %v499 = vpop.f32.mrf.mxu0
        %v500 = vadd.f32 %v447, %v499
        %501 = vmatmul.f32.gmra.mxu0 %v471
        %v502 = vpop.f32.mrf.mxu0
        %v503 = vadd.f32 %v452, %v502
        %504 = vmatmul.f32.gmra.mxu0 %v474
        %v505 = vpop.f32.mrf.mxu0
        %v506 = vadd.f32 %v457, %v505
        %507 = vmatmul.f32.gmra.mxu0 %v477
        %v508 = vpop.f32.mrf.mxu0
        %v509 = vadd.f32 %v462, %v508
        %510 = vdwg.mxu0
        %511 = vmatpush.msra.mxu0 0.0
        %512 = vmatpush.msra.mxu0 0.0
        %513 = vmatpush.msra.mxu0 0.0
        %514 = vmatpush.msra.mxu0 0.0
        %515 = vmatpush.msra.mxu0 0.0
        %516 = vmatpush.msra.mxu0 0.0
        %517 = vmatpush.msra.mxu0 0.0
        %518 = vmatpush.msra.mxu0 0.0
        %519 = vmatpush.msra.mxu0 0.0
        %520 = vmatpush.msra.mxu0 0.0
        %521 = vmatpush.msra.mxu0 0.0
        %522 = vmatpush.msra.mxu0 0.0
        %523 = vmatpush.msra.mxu0 0.0
        %524 = vmatpush.msra.mxu0 %v363
        %525 = vmatpush.msra.mxu0 %v304
        %526 = vmatpush.msra.mxu0 %v302
        %527 = vmatmul.f32.gmra.mxu0 %v465
        %v528 = vpop.f32.mrf.mxu0
        %v529 = vadd.f32 %v442, %v528
        %530 = vmatmul.f32.gmra.mxu0 %v468
        %v531 = vpop.f32.mrf.mxu0
        %v532 = vadd.f32 %v447, %v531
        %533 = vmatmul.f32.gmra.mxu0 %v471
        %v534 = vpop.f32.mrf.mxu0
        %v535 = vadd.f32 %v452, %v534
        %536 = vmatmul.f32.gmra.mxu0 %v474
        %v537 = vpop.f32.mrf.mxu0
        %v538 = vadd.f32 %v457, %v537
        %539 = vmatmul.f32.gmra.mxu0 %v477
        %v540 = vpop.f32.mrf.mxu0
        %v541 = vadd.f32 %v462, %v540
        %542 = vdwg.mxu0
        %v543 = vxor.u32 %v497, 2147483648
        %v544 = vxor.u32 %v529, 2147483648
        %v545 = vxor.u32 %v500, 2147483648
        %v546 = vxor.u32 %v532, 2147483648
        %v547 = vxor.u32 %v503, 2147483648
        %v548 = vxor.u32 %v535, 2147483648
        %v549 = vxor.u32 %v506, 2147483648
        %v550 = vxor.u32 %v538, 2147483648
        %v551 = vxor.u32 %v509, 2147483648
        %v552 = vxor.u32 %v541, 2147483648
        %v553 = vmul.f32 %v543, 1.442695
        %v554 = vpow.pop %v553
        %v555 = vmul.f32 %v544, 1.442695
        %v556 = vpow.pop %v555
        %v557 = vmul.f32 %v545, 1.442695
        %v558 = vpow.pop %v557
        %v559 = vmul.f32 %v546, 1.442695
        %v560 = vpow.pop %v559
        %v561 = vmul.f32 %v547, 1.442695
        %v562 = vpow.pop %v561
        %v563 = vmul.f32 %v548, 1.442695
        %v564 = vpow.pop %v563
        %v565 = vmul.f32 %v549, 1.442695
        %v566 = vpow.pop %v565
        %v567 = vmul.f32 %v550, 1.442695
        %v568 = vpow.pop %v567
        %v569 = vmul.f32 %v551, 1.442695
        %v570 = vpow.pop %v569
        %v571 = vmul.f32 %v552, 1.442695
        %v572 = vpow.pop %v571
        %v573 = vadd.f32 %v554, 1.0
        %v574 = vadd.f32 %v556, 1.0
        %v575 = vadd.f32 %v558, 1.0
        %v576 = vadd.f32 %v560, 1.0
        %v577 = vadd.f32 %v562, 1.0
        %v578 = vadd.f32 %v564, 1.0
        %v579 = vadd.f32 %v566, 1.0
        %v580 = vadd.f32 %v568, 1.0
        %v581 = vadd.f32 %v570, 1.0
        %v582 = vadd.f32 %v572, 1.0
        %v583 = vrcp.pop %v573
        %v584 = vmul.f32 %v573, %v583
        %v585 = vsub.f32 1.0, %v584
        %v586 = vmul.f32 %v583, %v585
        %v587 = vadd.f32 %v583, %v586
        %vm588 = vweird.f32 %v573
        %vm589 = vweird.f32 %v583
        %vm590 = vmor %vm588, %vm589
        %v591 = vsel %vm590, %v583, %v587
        %v592 = vand.u32 2147483647, %v573
        %vm593 = vcmp.eq.f32.partialorder %v592, 8.507059e+37
        %v594 = vand.u32 %v573, 2147483648
        %v595 = vor.u32 1.1754944e-38, %v594
        %v596 = vsel %vm593, %v595, %v591
        %v597 = vmul.f32 1.0, %v596
        %v598 = vrcp.pop %v574
        %v599 = vmul.f32 %v574, %v598
        %v600 = vsub.f32 1.0, %v599
        %v601 = vmul.f32 %v598, %v600
        %v602 = vadd.f32 %v598, %v601
        %vm603 = vweird.f32 %v574
        %vm604 = vweird.f32 %v598
        %vm605 = vmor %vm603, %vm604
        %v606 = vsel %vm605, %v598, %v602
        %v607 = vand.u32 2147483647, %v574
        %vm608 = vcmp.eq.f32.partialorder %v607, 8.507059e+37
        %v609 = vand.u32 %v574, 2147483648
        %v610 = vor.u32 1.1754944e-38, %v609
        %v611 = vsel %vm608, %v610, %v606
        %v612 = vmul.f32 1.0, %v611
        %v613 = vrcp.pop %v575
        %v614 = vmul.f32 %v575, %v613
        %v615 = vsub.f32 1.0, %v614
        %v616 = vmul.f32 %v613, %v615
        %v617 = vadd.f32 %v613, %v616
        %vm618 = vweird.f32 %v575
        %vm619 = vweird.f32 %v613
        %vm620 = vmor %vm618, %vm619
        %v621 = vsel %vm620, %v613, %v617
        %v622 = vand.u32 2147483647, %v575
        %vm623 = vcmp.eq.f32.partialorder %v622, 8.507059e+37
        %v624 = vand.u32 %v575, 2147483648
        %v625 = vor.u32 1.1754944e-38, %v624
        %v626 = vsel %vm623, %v625, %v621
        %v627 = vmul.f32 1.0, %v626
        %v628 = vrcp.pop %v576
        %v629 = vmul.f32 %v576, %v628
        %v630 = vsub.f32 1.0, %v629
        %v631 = vmul.f32 %v628, %v630
        %v632 = vadd.f32 %v628, %v631
        %vm633 = vweird.f32 %v576
        %vm634 = vweird.f32 %v628
        %vm635 = vmor %vm633, %vm634
        %v636 = vsel %vm635, %v628, %v632
        %v637 = vand.u32 2147483647, %v576
        %vm638 = vcmp.eq.f32.partialorder %v637, 8.507059e+37
        %v639 = vand.u32 %v576, 2147483648
        %v640 = vor.u32 1.1754944e-38, %v639
        %v641 = vsel %vm638, %v640, %v636
        %v642 = vmul.f32 1.0, %v641
        %v643 = vrcp.pop %v577
        %v644 = vmul.f32 %v577, %v643
        %v645 = vsub.f32 1.0, %v644
        %v646 = vmul.f32 %v643, %v645
        %v647 = vadd.f32 %v643, %v646
        %vm648 = vweird.f32 %v577
        %vm649 = vweird.f32 %v643
        %vm650 = vmor %vm648, %vm649
        %v651 = vsel %vm650, %v643, %v647
        %v652 = vand.u32 2147483647, %v577
        %vm653 = vcmp.eq.f32.partialorder %v652, 8.507059e+37
        %v654 = vand.u32 %v577, 2147483648
        %v655 = vor.u32 1.1754944e-38, %v654
        %v656 = vsel %vm653, %v655, %v651
        %v657 = vmul.f32 1.0, %v656
        %v658 = vrcp.pop %v578
        %v659 = vmul.f32 %v578, %v658
        %v660 = vsub.f32 1.0, %v659
        %v661 = vmul.f32 %v658, %v660
        %v662 = vadd.f32 %v658, %v661
        %vm663 = vweird.f32 %v578
        %vm664 = vweird.f32 %v658
        %vm665 = vmor %vm663, %vm664
        %v666 = vsel %vm665, %v658, %v662
        %v667 = vand.u32 2147483647, %v578
        %vm668 = vcmp.eq.f32.partialorder %v667, 8.507059e+37
        %v669 = vand.u32 %v578, 2147483648
        %v670 = vor.u32 1.1754944e-38, %v669
        %v671 = vsel %vm668, %v670, %v666
        %v672 = vmul.f32 1.0, %v671
        %v673 = vrcp.pop %v579
        %v674 = vmul.f32 %v579, %v673
        %v675 = vsub.f32 1.0, %v674
        %v676 = vmul.f32 %v673, %v675
        %v677 = vadd.f32 %v673, %v676
        %vm678 = vweird.f32 %v579
        %vm679 = vweird.f32 %v673
        %vm680 = vmor %vm678, %vm679
        %v681 = vsel %vm680, %v673, %v677
        %v682 = vand.u32 2147483647, %v579
        %vm683 = vcmp.eq.f32.partialorder %v682, 8.507059e+37
        %v684 = vand.u32 %v579, 2147483648
        %v685 = vor.u32 1.1754944e-38, %v684
        %v686 = vsel %vm683, %v685, %v681
        %v687 = vmul.f32 1.0, %v686
        %v688 = vrcp.pop %v580
        %v689 = vmul.f32 %v580, %v688
        %v690 = vsub.f32 1.0, %v689
        %v691 = vmul.f32 %v688, %v690
        %v692 = vadd.f32 %v688, %v691
        %vm693 = vweird.f32 %v580
        %vm694 = vweird.f32 %v688
        %vm695 = vmor %vm693, %vm694
        %v696 = vsel %vm695, %v688, %v692
        %v697 = vand.u32 2147483647, %v580
        %vm698 = vcmp.eq.f32.partialorder %v697, 8.507059e+37
        %v699 = vand.u32 %v580, 2147483648
        %v700 = vor.u32 1.1754944e-38, %v699
        %v701 = vsel %vm698, %v700, %v696
        %v702 = vmul.f32 1.0, %v701
        %v703 = vrcp.pop %v581
        %v704 = vmul.f32 %v581, %v703
        %v705 = vsub.f32 1.0, %v704
        %v706 = vmul.f32 %v703, %v705
        %v707 = vadd.f32 %v703, %v706
        %vm708 = vweird.f32 %v581
        %vm709 = vweird.f32 %v703
        %vm710 = vmor %vm708, %vm709
        %v711 = vsel %vm710, %v703, %v707
        %v712 = vand.u32 2147483647, %v581
        %vm713 = vcmp.eq.f32.partialorder %v712, 8.507059e+37
        %v714 = vand.u32 %v581, 2147483648
        %v715 = vor.u32 1.1754944e-38, %v714
        %v716 = vsel %vm713, %v715, %v711
        %v717 = vmul.f32 1.0, %v716
        %v718 = vrcp.pop %v582
        %v719 = vmul.f32 %v582, %v718
        %v720 = vsub.f32 1.0, %v719
        %v721 = vmul.f32 %v718, %v720
        %v722 = vadd.f32 %v718, %v721
        %vm723 = vweird.f32 %v582
        %vm724 = vweird.f32 %v718
        %vm725 = vmor %vm723, %vm724
        %v726 = vsel %vm725, %v718, %v722
        %v727 = vand.u32 2147483647, %v582
        %vm728 = vcmp.eq.f32.partialorder %v727, 8.507059e+37
        %v729 = vand.u32 %v582, 2147483648
        %v730 = vor.u32 1.1754944e-38, %v729
        %v731 = vsel %vm728, %v730, %v726
        %v732 = vmul.f32 1.0, %v731
        %v733 = vmul.f32 %v383, %v597
        %v734 = vmul.f32 %v415, %v612
        %v735 = vmul.f32 %v386, %v627
        %v736 = vmul.f32 %v418, %v642
        %v737 = vmul.f32 %v389, %v657
        %v738 = vmul.f32 %v421, %v672
        %v739 = vmul.f32 %v392, %v687
        %v740 = vmul.f32 %v424, %v702
        %v741 = vmul.f32 %v395, %v717
        %v742 = vmul.f32 %v427, %v732
        %v743 = vld [vmem:[%s5] sm:$0xff]
        %v744 = vld [vmem:[%s5 + $0x8] sm:$0xff]
        %v745 = vld [vmem:[%s5 + $0x10] sm:$0xf]
        %v746 = vld [vmem:[%s6] sm:$0xff]
        %v747 = vld [vmem:[%s6 + $0x8] sm:$0xff]
        %v748 = vld [vmem:[%s6 + $0x10] sm:$0xf]
        %750 = vset.pattern.permute.xlu0 0
        %751 = vperm.xlu0 %750, %v746
        %v752 = vpop.permute.xlu0 %751
        %755 = vset.pattern.permute.xlu0 0
        %756 = vperm.xlu0 %755, %v747
        %v757 = vpop.permute.xlu0 %756
        %760 = vset.pattern.permute.xlu0 0
        %761 = vperm.xlu0 %760, %v748
        %v762 = vpop.permute.xlu0 %761
        %vm764 = vcmask 326656
        %v766 = vsel %vm764, %v743, 0
        %v769 = vsel %vm764, %v744, 0
        %v772 = vsel %vm764, %v745, 0
        %774 = vmatpush.msra.mxu0 0.0
        %775 = vmatpush.msra.mxu0 0.0
        %776 = vmatpush.msra.mxu0 0.0
        %777 = vmatpush.msra.mxu0 0.0
        %778 = vmatpush.msra.mxu0 0.0
        %779 = vmatpush.msra.mxu0 0.0
        %780 = vmatpush.msra.mxu0 0.0
        %781 = vmatpush.msra.mxu0 0.0
        %782 = vmatpush.msra.mxu0 0.0
        %783 = vmatpush.msra.mxu0 0.0
        %784 = vmatpush.msra.mxu0 0.0
        %785 = vmatpush.msra.mxu0 %v741
        %786 = vmatpush.msra.mxu0 %v739
        %787 = vmatpush.msra.mxu0 %v737
        %788 = vmatpush.msra.mxu0 %v735
        %789 = vmatpush.msra.mxu0 %v733
        %790 = vmatmul.f32.gmra.mxu0 %v766
        %v791 = vpop.f32.mrf.mxu0
        %v792 = vadd.f32 %v752, %v791
        %793 = vmatmul.f32.gmra.mxu0 %v769
        %v794 = vpop.f32.mrf.mxu0
        %v795 = vadd.f32 %v757, %v794
        %796 = vmatmul.f32.gmra.mxu0 %v772
        %v797 = vpop.f32.mrf.mxu0
        %v798 = vadd.f32 %v762, %v797
        %799 = vdwg.mxu0
        %800 = vmatpush.msra.mxu0 0.0
        %801 = vmatpush.msra.mxu0 0.0
        %802 = vmatpush.msra.mxu0 0.0
        %803 = vmatpush.msra.mxu0 0.0
        %804 = vmatpush.msra.mxu0 0.0
        %805 = vmatpush.msra.mxu0 0.0
        %806 = vmatpush.msra.mxu0 0.0
        %807 = vmatpush.msra.mxu0 0.0
        %808 = vmatpush.msra.mxu0 0.0
        %809 = vmatpush.msra.mxu0 0.0
        %810 = vmatpush.msra.mxu0 0.0
        %811 = vmatpush.msra.mxu0 %v742
        %812 = vmatpush.msra.mxu0 %v740
        %813 = vmatpush.msra.mxu0 %v738
        %814 = vmatpush.msra.mxu0 %v736
        %815 = vmatpush.msra.mxu0 %v734
        %816 = vmatmul.f32.gmra.mxu0 %v766
        %v817 = vpop.f32.mrf.mxu0
        %v818 = vadd.f32 %v752, %v817
        %819 = vmatmul.f32.gmra.mxu0 %v769
        %v820 = vpop.f32.mrf.mxu0
        %v821 = vadd.f32 %v757, %v820
        %822 = vmatmul.f32.gmra.mxu0 %v772
        %v823 = vpop.f32.mrf.mxu0
        %v824 = vadd.f32 %v762, %v823
        %825 = vdwg.mxu0
        %826 = vst [vmem:[%s298] sm:$0xff] %v792
        %827 = vst [vmem:[%s298 + $0x8] sm:$0xff] %v818
        %828 = vst [vmem:[%s298 + $0x10] sm:$0xff] %v795
        %829 = vst [vmem:[%s298 + $0x18] sm:$0xff] %v821
        %830 = vst [vmem:[%s298 + $0x20] sm:$0xf] %v798
        %831 = vst [vmem:[%s298 + $0x28] sm:$0xf] %v824
        %s832 = sand.u32 %s184, 1
        %s833 = scalar_lea.sflag [#allocation4], %s832
        %s834 = sand.u32 %s184, 1
        %s835 = smul.addr %s834, 48
        %s836 = scalar_lea.vmem [#allocation5], %s835
        // Predicated region
        $region53: #{tpu_custom_call.1} parent=47 // pred_check
          %p837 = pneg %p194
        $region54: #{tpu_custom_call.1} parent=47 // pred_check_branch
          %839 = sbr.rel (%p837) target = $region56
        $region55: #{tpu_custom_call.1} parent=47 // pred_region
          %s840 = smul.u32 2, %s24
          %842 = vsyncadd %s833, 0
          %s843 = smul.addr %s840, 8
          %s844 = scalar_lea.hbm %s7, %s843
          %s845 = sshll.u32 %s836, 4
          %s846 = int_to_ptr.vmem [resolvable:$true] %s845
          %s847 = sshll.u32 %s844, 4
          %s848 = int_to_ptr.hbm [resolvable:$true] %s847
          %853 = dma.vmem_to_hbm [thread:$0]  %s846, 768, %s848, %s833, 256, 1024, 16
        $region56: #{tpu_custom_call.1} parent=47 // pred_fallthru
          _
      $region48: #{tpu_custom_call.1} parent=5 // pred_fallthru
        _
      %p854 = scmp.le.s32.totalorder 2, %s19
      // Predicated region
      $region57: #{tpu_custom_call.1} parent=5 // pred_check
        %p855 = pneg %p854
      $region58: #{tpu_custom_call.1} parent=5 // pred_check_branch
        %857 = sbr.rel (%p855) target = $region60
      $region59: #{tpu_custom_call.1} parent=5 // pred_region
        %s858 = ssub.s32 %s19, 2
        // Predicated region
        $region61: #{tpu_custom_call.1} parent=59 // pred_check
          %p859 = pneg %p200
        $region62: #{tpu_custom_call.1} parent=59 // pred_check_branch
          %861 = sbr.rel (%p859) target = $region64
        $region63: #{tpu_custom_call.1} parent=59 // pred_region
          %s862 = sand.u32 %s185, 1
          %s863 = scalar_lea.sflag [#allocation4], %s862
          %s864 = sand.u32 %s185, 1
          %s865 = smul.addr %s864, 48
          %s866 = scalar_lea.vmem [#allocation5], %s865
          %868 = dma.done %s863, 768
        $region64: #{tpu_custom_call.1} parent=59 // pred_fallthru
          _
      $region60: #{tpu_custom_call.1} parent=5 // pred_fallthru
        _
    $region6: #{tpu_custom_call.1} parent=1 // loop_footer
      %s23 = sadd.s32 1, %s19
    $region7: #{tpu_custom_call.1} parent=1 // loop_footer_branch
      %18 = sbr.rel target = $region3
    $region8: #{tpu_custom_call.1} parent=1 // loop_exit
      _
    %869 = vsyncpa [#allocation3], 1
    %s870 = scalar_lea.sflag [#allocation3], 1
    %871 = vsyncpa %s870, 1
    %872 = vsyncpa [#allocation4], 1
    %s873 = scalar_lea.sflag [#allocation4], 1
    %874 = vsyncpa %s873, 1

</llo_original>
